<compile_context>
chip_gen: v6e
topology: v6e:2x2x1
jax: 0.10.0
libtpu: 0.0.40
codegen_flags: <defaults>
</compile_context>

<pallas_src>
import math

import jax
import jax.numpy as jnp
from jax import lax
from jax.experimental import pallas as pl
from jax.experimental.pallas import tpu as pltpu


# ----------------------------------------------------------------------------
# Small (synthetic) configuration consistent with the module structure
# ----------------------------------------------------------------------------
CLIP_IMAGE_SIZE = 32          # stands in for 336
CLIP_PATCH_SIZE = 8           # stands in for 14  -> 4x4 = 16 patch tokens
CLIP_HIDDEN = 32              # image_dim_out (stands in for 1024)
CLIP_HEADS = 4
CLIP_INTERMEDIATE = 64
CLIP_TOTAL_LAYERS = 3
CLIP_LAYER_IDX = -2           # phi3v uses layer_idx=-2
CLIP_USED_LAYERS = CLIP_TOTAL_LAYERS + CLIP_LAYER_IDX + 1

VOCAB_SIZE = 128
HIDDEN_SIZE = 64
NUM_HEADS = 4
HEAD_DIM = HIDDEN_SIZE // NUM_HEADS
INTERMEDIATE_SIZE = 128
NUM_LAYERS = 2
RMS_EPS = 1e-6
LN_EPS = 1e-5

IMAGE_TOKEN_ID = 99           # stands in for _IMAGE_TOKEN_ID = 32044


def _compute_vmem_limit():
    """Generation-aware VMEM limit: ~3/4 of physical VMEM, capped at 110 MiB."""
    cap = 64 * 1024 * 1024
    try:
        info = pltpu.get_tpu_info()
        cap = int(getattr(info, "vmem_capacity_bytes", cap))
    except Exception:
        pass
    return max(32 * 1024 * 1024, min((cap * 3) // 4, 110 * 1024 * 1024))


VMEM_LIMIT = _compute_vmem_limit()


# ----------------------------------------------------------------------------
# Tiling helpers
# ----------------------------------------------------------------------------
def _round_up(x, m):
    return ((x + m - 1) // m) * m


def _choose_m_tile(M, max_tile=512):
    """Pad M only to a multiple of 8; pick a tile that divides the padded M."""
    Mp = _round_up(M, 8)
    if Mp <= max_tile:
        return Mp, Mp
    for t in (512, 384, 256, 128, 64, 32, 16, 8):
        if Mp % t == 0:
            return Mp, t
    return Mp, 8


def _choose_n_tile(N, targets=(512, 256, 128)):
    for t in targets:
        if N > t and N % t == 0:
            return t
    return N


def _choose_k_tile(K, targets=(512, 256)):
    for t in targets:
        if K > t and K % t == 0:
            return t
    return K


def _pad_rows(x, Mp):
    M = x.shape[0]
    return x if Mp == M else jnp.pad(x, ((0, Mp - M), (0, 0)))


# ----------------------------------------------------------------------------
# Fused [norm] -> K-tiled matmul -> [bias] -> [activation] -> [residual]
# ----------------------------------------------------------------------------
def _fused_linear_kernel_factory(norm, has_bias, has_residual, activation, eps,
                                 nk, tk):
    def kernel(*refs):
        idx = 0
        x_ref = refs[idx]; idx += 1
        g_ref = b_ref = None
        if norm is not None:
            g_ref = refs[idx]; idx += 1
            if norm == "layer":
                b_ref = refs[idx]; idx += 1
        w_ref = refs[idx]; idx += 1
        bias_ref = None
        if has_bias:
            bias_ref = refs[idx]; idx += 1
        res_ref = None
        if has_residual:
            res_ref = refs[idx]; idx += 1
        o_ref = refs[idx]; idx += 1
        acc_ref = refs[idx]; idx += 1
        xn_ref = refs[idx] if norm is not None else None

        j = pl.program_id(1)
        k = pl.program_id(2)

        if norm is not None:
            # Norm + bf16 cast computed ONCE per M-tile (j==0, k==0); the N
            # and K axes are "arbitrary" so this runs before all (j, k) steps.
            @pl.when(jnp.logical_and(j == 0, k == 0))
            def _():
                xf = x_ref[...].astype(jnp.float32)
                if norm == "rms":
                    xf = xf * lax.rsqrt(jnp.mean(xf * xf, axis=-1,
                                                 keepdims=True) + eps)
                    xf = xf * g_ref[...]
                else:  # layer norm
                    mu = jnp.mean(xf, axis=-1, keepdims=True)
                    var = jnp.mean((xf - mu) ** 2, axis=-1, keepdims=True)
                    xf = (xf - mu) * lax.rsqrt(var + eps) * g_ref[...] + b_ref[...]
                xn_ref[...] = xf.astype(jnp.bfloat16)

        @pl.when(k == 0)
        def _():
            acc_ref[...] = jnp.zeros_like(acc_ref)

        if norm is not None:
            if nk == 1:
                xk = xn_ref[...]
            else:
                off = pl.multiple_of(k * tk, tk)
                xk = xn_ref[:, pl.ds(off, tk)]
        else:
            if nk == 1:
                xk = x_ref[...].astype(jnp.bfloat16)
            else:
                off = pl.multiple_of(k * tk, tk)
                xk = x_ref[:, pl.ds(off, tk)].astype(jnp.bfloat16)

        # bf16 MXU matmul (weights already bf16 in HBM), f32 accumulation.
        acc_ref[...] += jnp.dot(xk, w_ref[...],
                                preferred_element_type=jnp.float32)

        @pl.when(k == nk - 1)
        def _():
            y = acc_ref[...]
            if has_bias:
                y = y + bias_ref[...].astype(jnp.float32)
            if activation == "gelu":            # nn.GELU default (exact)
                y = jax.nn.gelu(y, approximate=False)
            elif activation == "quick_gelu":    # CLIP hidden_act='quick_gelu'
                y = y * jax.nn.sigmoid(1.702 * y)
            elif activation == "silu":
                y = y * jax.nn.sigmoid(y)
            if has_residual:
                y = y + res_ref[...].astype(jnp.float32)
            o_ref[...] = y.astype(o_ref.dtype)
    return kernel


def fused_linear(x, w, *, bias=None, norm=None, gamma=None, beta=None,
                 residual=None, activation=None, eps=LN_EPS,
                 out_dtype=jnp.bfloat16):
    """y = act(norm(x) @ w + bias) + residual, tiled over (M, N, K)."""
    M, K = x.shape
    K2, N = w.shape
    assert K == K2
    Mp, tm = _choose_m_tile(M)
    tn = _choose_n_tile(N)
    tk = _choose_k_tile(K)
    nk = K // tk

    args = [_pad_rows(x, Mp)]
    # x streamed once per M-tile (block index constant over j, k).
    in_specs = [pl.BlockSpec((tm, K), lambda i, j, k: (i, 0))]
    if norm is not None:
        args.append(gamma.reshape(1, K).astype(jnp.float32))
        in_specs.append(pl.BlockSpec((1, K), lambda i, j, k: (0, 0)))
        if norm == "layer":
            args.append(beta.reshape(1, K).astype(jnp.float32))
            in_specs.append(pl.BlockSpec((1, K), lambda i, j, k: (0, 0)))
    args.append(w)                                                # bf16 weights
    in_specs.append(pl.BlockSpec((tk, tn), lambda i, j, k: (k, j)))
    has_bias = bias is not None
    if has_bias:
        args.append(bias.reshape(1, N))
        in_specs.append(pl.BlockSpec((1, tn), lambda i, j, k: (0, j)))
    has_res = residual is not None
    if has_res:
        args.append(_pad_rows(residual, Mp))
        in_specs.append(pl.BlockSpec((tm, tn), lambda i, j, k: (i, j)))

    scratch = [pltpu.VMEM((tm, tn), jnp.float32)]         # f32 accumulator
    if norm is not None:
        scratch.append(pltpu.VMEM((tm, K), jnp.bfloat16))  # normed x (per M-tile)

    out = pl.pallas_call(
        _fused_linear_kernel_factory(norm, has_bias, has_res, activation, eps,
                                     nk, tk),
        out_shape=jax.ShapeDtypeStruct((Mp, N), out_dtype),
        grid=(Mp // tm, N // tn, nk),
        in_specs=in_specs,
        out_specs=pl.BlockSpec((tm, tn), lambda i, j, k: (i, j)),
        scratch_shapes=scratch,
        compiler_params=pltpu.CompilerParams(
            # j kept "arbitrary" so the per-M-tile norm scratch is always
            # initialized on the core that consumes it.
            dimension_semantics=("parallel", "arbitrary", "arbitrary"),
            vmem_limit_bytes=VMEM_LIMIT),
    )(*args)
    return out if Mp == M else out[:M]


# ----------------------------------------------------------------------------
# Fused RMSNorm -> SwiGLU (gate/up matmuls + silu(gate)*up), K-tiled
# ----------------------------------------------------------------------------
def _swiglu_kernel_factory(eps, nk, tk):
    def kernel(x_ref, g_ref, gw_ref, uw_ref, o_ref, gacc, uacc, xn_ref):
        j = pl.program_id(1)
        k = pl.program_id(2)

        @pl.when(jnp.logical_and(j == 0, k == 0))
        def _():
            xf = x_ref[...].astype(jnp.float32)
            xf = xf * lax.rsqrt(jnp.mean(xf * xf, axis=-1, keepdims=True) + eps)
            xn_ref[...] = (xf * g_ref[...]).astype(jnp.bfloat16)

        @pl.when(k == 0)
        def _():
            gacc[...] = jnp.zeros_like(gacc)
            uacc[...] = jnp.zeros_like(uacc)

        if nk == 1:
            xk = xn_ref[...]
        else:
            off = pl.multiple_of(k * tk, tk)
            xk = xn_ref[:, pl.ds(off, tk)]
        gacc[...] += jnp.dot(xk, gw_ref[...], preferred_element_type=jnp.float32)
        uacc[...] += jnp.dot(xk, uw_ref[...], preferred_element_type=jnp.float32)

        @pl.when(k == nk - 1)
        def _():
            g = gacc[...]
            o_ref[...] = (g * jax.nn.sigmoid(g) * uacc[...]).astype(o_ref.dtype)
    return kernel


def fused_rmsnorm_swiglu(x, gamma, gate_w, up_w, eps=RMS_EPS,
                         out_dtype=jnp.bfloat16):
    M, K = x.shape
    _, N = gate_w.shape
    Mp, tm = _choose_m_tile(M)
    tn = _choose_n_tile(N)
    tk = _choose_k_tile(K)
    nk = K // tk
    out = pl.pallas_call(
        _swiglu_kernel_factory(eps, nk, tk),
        out_shape=jax.ShapeDtypeStruct((Mp, N), out_dtype),
        grid=(Mp // tm, N // tn, nk),
        in_specs=[pl.BlockSpec((tm, K), lambda i, j, k: (i, 0)),
                  pl.BlockSpec((1, K), lambda i, j, k: (0, 0)),
                  pl.BlockSpec((tk, tn), lambda i, j, k: (k, j)),
                  pl.BlockSpec((tk, tn), lambda i, j, k: (k, j))],
        out_specs=pl.BlockSpec((tm, tn), lambda i, j, k: (i, j)),
        scratch_shapes=[pltpu.VMEM((tm, tn), jnp.float32),
                        pltpu.VMEM((tm, tn), jnp.float32),
                        pltpu.VMEM((tm, K), jnp.bfloat16)],
        compiler_params=pltpu.CompilerParams(
            dimension_semantics=("parallel", "arbitrary", "arbitrary"),
            vmem_limit_bytes=VMEM_LIMIT),
    )(_pad_rows(x, Mp), gamma.reshape(1, K).astype(jnp.float32), gate_w, up_w)
    return out if Mp == M else out[:M]


# ----------------------------------------------------------------------------
# Standalone norm kernel (used for CLIP pre-LN and final RMSNorm)
# ----------------------------------------------------------------------------
def _norm_kernel_factory(kind, eps):
    def kernel(*refs):
        if kind == "layer":
            x_ref, g_ref, b_ref, o_ref = refs
        else:
            x_ref, g_ref, o_ref = refs
        x = x_ref[...].astype(jnp.float32)
        if kind == "layer":
            mu = jnp.mean(x, axis=-1, keepdims=True)
            var = jnp.mean((x - mu) ** 2, axis=-1, keepdims=True)
            y = (x - mu) * lax.rsqrt(var + eps) * g_ref[...] + b_ref[...]
        else:
            y = x * lax.rsqrt(jnp.mean(x * x, axis=-1, keepdims=True) + eps)
            y = y * g_ref[...]
        o_ref[...] = y.astype(o_ref.dtype)
    return kernel


def pallas_norm(x, g, b=None, *, kind="rms", eps=RMS_EPS,
                out_dtype=jnp.bfloat16):
    M, D = x.shape
    Mp, tm = _choose_m_tile(M)
    args = [_pad_rows(x, Mp), g.reshape(1, D).astype(jnp.float32)]
    in_specs = [pl.BlockSpec((tm, D), lambda i: (i, 0)),
                pl.BlockSpec((1, D), lambda i: (0, 0))]
    if kind == "layer":
        args.append(b.reshape(1, D).astype(jnp.float32))
        in_specs.append(pl.BlockSpec((1, D), lambda i: (0, 0)))
    out = pl.pallas_call(
        _norm_kernel_factory(kind, eps),
        out_shape=jax.ShapeDtypeStruct((Mp, D), out_dtype),
        grid=(Mp // tm,),
        in_specs=in_specs,
        out_specs=pl.BlockSpec((tm, D), lambda i: (i, 0)),
        compiler_params=pltpu.CompilerParams(
            dimension_semantics=("parallel",), vmem_limit_bytes=VMEM_LIMIT),
    )(*args)
    return out if Mp == M else out[:M]


# ----------------------------------------------------------------------------
# Flash-style multi-head attention (heads on grid, KV-tiled online softmax,
# optional fused RoPE, causal tile skipping)
# ----------------------------------------------------------------------------
def _rope_rotate(x, cos, sin):
    half = x.shape[-1] // 2
    x1 = x[:, :half]
    x2 = x[:, half:]
    rot = jnp.concatenate([-x2, x1], axis=-1)
    return x * cos + rot * sin


def _flash_attn_kernel_factory(scale, causal, use_rope, tq, tkv, nkv):
    def kernel(*refs):
        if use_rope:
            (q_ref, k_ref, v_ref, cq_ref, sq_ref, ck_ref, sk_ref,
             o_ref, q_sc, m_sc, l_sc, acc_sc) = refs
        else:
            q_ref, k_ref, v_ref, o_ref, q_sc, m_sc, l_sc, acc_sc = refs

        kv_idx = pl.program_id(2)
        q_start = pl.program_id(1) * tq
        kv_start = kv_idx * tkv

        @pl.when(kv_idx == 0)
        def _():
            q = q_ref[0].astype(jnp.float32)
            if use_rope:
                q = _rope_rotate(q, cq_ref[...], sq_ref[...])
            q_sc[...] = (q * scale).astype(jnp.bfloat16)
            m_sc[...] = jnp.full_like(m_sc, -1e30)
            l_sc[...] = jnp.zeros_like(l_sc)
            acc_sc[...] = jnp.zeros_like(acc_sc)

        def compute():
            k = k_ref[0].astype(jnp.float32)
            if use_rope:
                k = _rope_rotate(k, ck_ref[...], sk_ref[...])
            k = k.astype(jnp.bfloat16)
            v = v_ref[0].astype(jnp.bfloat16)
            # contract on feature dim directly: no k.T transpose
            s = lax.dot_general(q_sc[...], k, (((1,), (1,)), ((), ())),
                                preferred_element_type=jnp.float32)  # (tq, tkv)
            if causal:
                row = lax.broadcasted_iota(jnp.int32, (tq, tkv), 0) + q_start
                col = lax.broadcasted_iota(jnp.int32, (tq, tkv), 1) + kv_start
                s = jnp.where(col <= row, s, -1e30)
            m_prev = m_sc[...]
            m_new = jnp.maximum(m_prev, jnp.max(s, axis=-1, keepdims=True))
            alpha = jnp.exp(m_prev - m_new)
            p = jnp.exp(s - m_new)
            l_sc[...] = alpha * l_sc[...] + jnp.sum(p, axis=-1, keepdims=True)
            acc_sc[...] = alpha * acc_sc[...] + jnp.dot(
                p.astype(jnp.bfloat16), v, preferred_element_type=jnp.float32)
            m_sc[...] = m_new

        if causal:
            # skip fully-masked KV tiles
            @pl.when(kv_start <= q_start + tq - 1)
            def _():
                compute()
        else:
            compute()

        @pl.when(kv_idx == nkv - 1)
        def _():
            inv = pl.reciprocal(l_sc[...], approx=True)
            o_ref[0] = (acc_sc[...] * inv).astype(o_ref.dtype)
    return kernel


def pallas_attention(q, k, v, *, num_heads, causal, rope_cos=None,
                     rope_sin=None):
    """q, k, v: (B, S, num_heads*head_dim). Flash attention per head."""
    B, S, D = q.shape
    hd = D // num_heads
    scale = 1.0 / math.sqrt(hd)
    use_rope = rope_cos is not None

    def to_heads(x):
        return x.reshape(B, S, num_heads, hd).transpose(0, 2, 1, 3) \
                .reshape(B * num_heads, S, hd)

    qh, kh, vh = to_heads(q), to_heads(k), to_heads(v)
    BH = B * num_heads
    tq = 128 if S % 128 == 0 else S
    tkv = 128 if S % 128 == 0 else S
    nq, nkv = S // tq, S // tkv

    args = [qh, kh, vh]
    in_specs = [pl.BlockSpec((1, tq, hd), lambda b, qi, kv: (b, qi, 0)),
                pl.BlockSpec((1, tkv, hd), lambda b, qi, kv: (b, kv, 0)),
                pl.BlockSpec((1, tkv, hd), lambda b, qi, kv: (b, kv, 0))]
    if use_rope:
        args += [rope_cos, rope_sin, rope_cos, rope_sin]
        in_specs += [pl.BlockSpec((tq, hd), lambda b, qi, kv: (qi, 0)),
                     pl.BlockSpec((tq, hd), lambda b, qi, kv: (qi, 0)),
                     pl.BlockSpec((tkv, hd), lambda b, qi, kv: (kv, 0)),
                     pl.BlockSpec((tkv, hd), lambda b, qi, kv: (kv, 0))]

    out = pl.pallas_call(
        _flash_attn_kernel_factory(scale, causal, use_rope, tq, tkv, nkv),
        out_shape=jax.ShapeDtypeStruct((BH, S, hd), q.dtype),
        grid=(BH, nq, nkv),
        in_specs=in_specs,
        out_specs=pl.BlockSpec((1, tq, hd), lambda b, qi, kv: (b, qi, 0)),
        scratch_shapes=[pltpu.VMEM((tq, hd), jnp.bfloat16),   # roped+scaled q
                        pltpu.VMEM((tq, 1), jnp.float32),     # m
                        pltpu.VMEM((tq, 1), jnp.float32),     # l
                        pltpu.VMEM((tq, hd), jnp.float32)],   # acc
        compiler_params=pltpu.CompilerParams(
            dimension_semantics=("parallel", "parallel", "arbitrary"),
            vmem_limit_bytes=VMEM_LIMIT),
    )(*args)
    return out.reshape(B, num_heads, S, hd).transpose(0, 2, 1, 3) \
              .reshape(B, S, D)


# ----------------------------------------------------------------------------
# CLIP-like vision tower (img_processor), truncated at layer_idx=-2
# ----------------------------------------------------------------------------
def clip_vision_forward(pixel_flat, p):
    N, C, H, W = pixel_flat.shape
    ps = CLIP_PATCH_SIZE
    Hp, Wp = H // ps, W // ps
    # non-overlapping patch extraction == Conv2d(kernel=ps, stride=ps, bias=False)
    patches = pixel_flat.reshape(N, C, Hp, ps, Wp, ps)
    patches = patches.transpose(0, 2, 4, 1, 3, 5).reshape(N * Hp * Wp, C * ps * ps)
    x = fused_linear(patches, p["patch_w"])                        # (N*L, Dv) bf16
    Dv = CLIP_HIDDEN
    L = Hp * Wp
    x = x.reshape(N, L, Dv)
    cls = jnp.broadcast_to(p["class_emb"].reshape(1, 1, Dv), (N, 1, Dv))
    x = jnp.concatenate([cls, x], axis=1) + p["pos_emb"][None]     # (N, L+1, Dv)
    S = L + 1
    x = pallas_norm(x.reshape(N * S, Dv), p["pre_ln_g"], p["pre_ln_b"],
                    kind="layer", eps=LN_EPS)                      # (N*S, Dv)

    nh = CLIP_HEADS
    for lp in p["layers"]:
        # self-attention block: LN1 fused into the fused-QKV matmul
        qkv = fused_linear(x, lp["qkv_w"], bias=lp["qkv_b"],
                           norm="layer", gamma=lp["ln1_g"], beta=lp["ln1_b"],
                           eps=LN_EPS)                             # (N*S, 3Dv)
        q, k, v = jnp.split(qkv, 3, axis=-1)
        attn = pallas_attention(q.reshape(N, S, Dv), k.reshape(N, S, Dv),
                                v.reshape(N, S, Dv), num_heads=nh, causal=False)
        attn = attn.reshape(N * S, Dv)
        # out-proj with bias + residual fused
        x = fused_linear(attn, lp["o_w"], bias=lp["o_b"], residual=x)
        # MLP block: LN2 fused into fc1 (+quick_gelu); fc2 fuses bias + residual
        h = fused_linear(x, lp["fc1_w"], bias=lp["fc1_b"],
                         norm="layer", gamma=lp["ln2_g"], beta=lp["ln2_b"],
                         activation="quick_gelu", eps=LN_EPS)
        x = fused_linear(h, lp["fc2_w"], bias=lp["fc2_b"], residual=x)
    # truncated tower (layer_idx=-2): no post_layernorm
    return x.reshape(N, S, Dv)   # CLS token at index 0


# ----------------------------------------------------------------------------
# Phi3HDImageEmbedding: HD transform + image projection
# ----------------------------------------------------------------------------
def reshape_hd_patches_2x2merge(image_features, h_crop, w_crop):
    N, L, C = image_features.shape
    num_images = N // (h_crop * w_crop)
    H = int(round(math.sqrt(L)))
    x = image_features.reshape(N, H, H, C)
    x = x.reshape(N, H // 2, 2, H // 2, 2, C).transpose(0, 1, 3, 2, 4, 5) \
         .reshape(N, -1, 4 * C)
    x = x.reshape(num_images, h_crop, w_crop, H // 2, H // 2, -1) \
         .transpose(0, 1, 3, 2, 4, 5)
    x = x.reshape(num_images, h_crop * H // 2, w_crop * H // 2, 4 * C)
    return x


def add_image_newline(image_features_hd, sub_GN):
    num_images, h, w, hid = image_features_hd.shape
    newline = jnp.broadcast_to(sub_GN.reshape(1, 1, 1, hid), (num_images, h, 1, hid))
    return jnp.concatenate([image_features_hd, newline], axis=2) \
              .reshape(num_images, -1, hid)


def phi3_hd_image_embedding(pixel_values, image_sizes_static, p):
    """
    pixel_values: (num_images, num_crops, c, h, w)  NCHW per crop.
    output: list of (num_img_tokens_i, hidden_size) arrays (one per image)
    """
    num_images, num_crops, c, h, w = pixel_values.shape
    pixel_flat = pixel_values.reshape(num_images * num_crops, c, h, w)
    feats = clip_vision_forward(pixel_flat, p["clip"])          # (N*crops, L+1, Dv)
    feats = feats[:, 1:]                                        # 'patch' feats, drop CLS
    L = feats.shape[1]
    feats = feats.reshape(num_images, num_crops, L, CLIP_HIDDEN)

    # hd_transform_order == 'sub_glb'
    global_feats = feats[:, 0]                                  # (num_images, L, Dv)
    g_hd = reshape_hd_patches_2x2merge(global_feats, 1, 1)
    g_hd_nl = add_image_newline(g_hd, p["sub_GN"])

    embs, counts = [], []
    for i, (ih, iw) in enumerate(image_sizes_static):
        h_crop = ih // CLIP_IMAGE_SIZE
        w_crop = iw // CLIP_IMAGE_SIZE
        n_sub = h_crop * w_crop
        sub = feats[i, 1:1 + n_sub]                             # (n_sub, L, Dv)
        sub_hd = reshape_hd_patches_2x2merge(sub, h_crop, w_crop)
        sub_hd_nl = add_image_newline(sub_hd, p["sub_GN"])
        emb = jnp.concatenate(
            [sub_hd_nl[0], p["glb_GN"].reshape(1, -1), g_hd_nl[i]], axis=0)
        embs.append(emb)
        counts.append(emb.shape[0])

    # Batched img_projection: Linear -> GELU -> Linear over all images' rows.
    all_emb = jnp.concatenate(embs, axis=0)
    proj = fused_linear(all_emb, p["proj1_w"], bias=p["proj1_b"], activation="gelu")
    proj = fused_linear(proj, p["proj2_w"], bias=p["proj2_b"])

    outputs, off = [], 0
    for n in counts:
        outputs.append(proj[off:off + n])
        off += n
    return outputs


# ----------------------------------------------------------------------------
# Llama-style language model (prefill only)
# ----------------------------------------------------------------------------
def _rope_cos_sin(positions, head_dim, base=10000.0):
    # TODO(synk): Phi-3 longrope/su scaling not modeled (plain neox rope).
    half = head_dim // 2
    inv_freq = 1.0 / (base ** (jnp.arange(half, dtype=jnp.float32) / half))
    freqs = positions.astype(jnp.float32)[:, None] * inv_freq[None, :]   # (S, half)
    cos = jnp.concatenate([jnp.cos(freqs), jnp.cos(freqs)], axis=-1)     # (S, hd)
    sin = jnp.concatenate([jnp.sin(freqs), jnp.sin(freqs)], axis=-1)
    return cos, sin


def llama_model(inputs_embeds, positions, p):
    # TODO(synk): kv_caches / attn_metadata (paged KV cache) not modeled;
    # this is a pure prefill pass with in-kernel causal flash attention.
    x = inputs_embeds                                            # (S, D) bf16
    S, D = x.shape
    nh, hd = NUM_HEADS, HEAD_DIM
    cos, sin = _rope_cos_sin(positions, hd)                      # (S, hd) each
    for lp in p["layers"]:
        # attention block: RMSNorm fused into fused-QKV matmul (no bias)
        qkv = fused_linear(x, lp["qkv_w"], norm="rms",
                           gamma=lp["attn_norm"], eps=RMS_EPS)   # (S, 3D)
        q, k, v = jnp.split(qkv, 3, axis=-1)
        # RoPE fused into the attention kernel (no extra Q/K HBM round trip)
        attn = pallas_attention(q[None], k[None], v[None], num_heads=nh,
                                causal=True, rope_cos=cos, rope_sin=sin)[0]
        x = fused_linear(attn, lp["o_w"], residual=x)            # o_proj + residual
        # MLP block: RMSNorm fused into SwiGLU; down_proj fuses residual
        h = fused_rmsnorm_swiglu(x, lp["mlp_norm"], lp["gate_w"], lp["up_w"],
                                 eps=RMS_EPS)
        x = fused_linear(h, lp["down_w"], residual=x)
    return pallas_norm(x, p["final_norm"], kind="rms", eps=RMS_EPS)


# ----------------------------------------------------------------------------
# Phi3VForCausalLM.forward equivalent
# ----------------------------------------------------------------------------
def merge_multimodal_embeddings(input_ids, inputs_embeds, vision_embeddings,
                                image_token_id):
    vision = jnp.concatenate(vision_embeddings, axis=0)          # (total_img_tokens, D)
    mask = input_ids == image_token_id
    idx = jnp.cumsum(mask.astype(jnp.int32)) - 1
    # TODO(synk): index clipping silently maps excess image tokens to the last
    # vision row instead of raising a count-mismatch error like the reference.
    idx = jnp.clip(idx, 0, vision.shape[0] - 1)
    gathered = vision[idx]
    return jnp.where(mask[:, None], gathered, inputs_embeds)


def phi3v_forward(params, input_ids, positions, pixel_values, image_sizes_static):
    vision_embeddings = phi3_hd_image_embedding(
        pixel_values, image_sizes_static, params["vision_embed_tokens"])
    inputs_embeds = jnp.take(params["embed_tokens"], input_ids, axis=0)
    inputs_embeds = merge_multimodal_embeddings(
        input_ids, inputs_embeds, vision_embeddings, IMAGE_TOKEN_ID)
    hidden_states = llama_model(inputs_embeds, positions, params["language_model"])
    return hidden_states


# ----------------------------------------------------------------------------
# Deterministic parameter init (weights/biases stored bf16; Q/K/V pre-fused)
# ----------------------------------------------------------------------------
class _Keys:
    def __init__(self, key):
        self._key = key

    def __call__(self):
        self._key, sub = jax.random.split(self._key)
        return sub


def init_params(key):
    kg = _Keys(key)
    wdt = jnp.bfloat16          # weights/biases stored bf16 in HBM

    def w(shape, s=0.02):
        return (s * jax.random.normal(kg(), shape, dtype=jnp.float32)).astype(wdt)

    ones = lambda shape: jnp.ones(shape, jnp.float32)    # norm scales stay f32
    zeros_f = lambda shape: jnp.zeros(shape, jnp.float32)
    zeros_b = lambda shape: jnp.zeros(shape, wdt)

    Dv, ps, C = CLIP_HIDDEN, CLIP_PATCH_SIZE, 3
    L = (CLIP_IMAGE_SIZE // ps) ** 2

    clip_layers = []
    for _ in range(CLIP_USED_LAYERS):
        clip_layers.append(dict(
            ln1_g=ones((Dv,)), ln1_b=zeros_f((Dv,)),
            qkv_w=w((Dv, 3 * Dv)), qkv_b=zeros_b((3 * Dv,)),   # fused [Wq|Wk|Wv]
            o_w=w((Dv, Dv)), o_b=zeros_b((Dv,)),
            ln2_g=ones((Dv,)), ln2_b=zeros_f((Dv,)),
            fc1_w=w((Dv, CLIP_INTERMEDIATE)), fc1_b=zeros_b((CLIP_INTERMEDIATE,)),
            fc2_w=w((CLIP_INTERMEDIATE, Dv)), fc2_b=zeros_b((Dv,)),
        ))
    clip = dict(
        patch_w=w((C * ps * ps, Dv)),
        class_emb=w((Dv,)),
        pos_emb=w((L + 1, Dv)),
        pre_ln_g=ones((Dv,)), pre_ln_b=zeros_f((Dv,)),
        layers=clip_layers,
    )

    vision = dict(
        clip=clip,
        glb_GN=w((4 * Dv,)),
        sub_GN=w((4 * Dv,)),
        proj1_w=w((4 * Dv, HIDDEN_SIZE)), proj1_b=zeros_b((HIDDEN_SIZE,)),
        proj2_w=w((HIDDEN_SIZE, HIDDEN_SIZE)), proj2_b=zeros_b((HIDDEN_SIZE,)),
    )

    lm_layers = []
    for _ in range(NUM_LAYERS):
        lm_layers.append(dict(
            attn_norm=ones((HIDDEN_SIZE,)),
            qkv_w=w((HIDDEN_SIZE, 3 * HIDDEN_SIZE)),          # fused [Wq|Wk|Wv]
            o_w=w((HIDDEN_SIZE, HIDDEN_SIZE)),
            mlp_norm=ones((HIDDEN_SIZE,)),
            gate_w=w((HIDDEN_SIZE, INTERMEDIATE_SIZE)),
            up_w=w((HIDDEN_SIZE, INTERMEDIATE_SIZE)),
            down_w=w((INTERMEDIATE_SIZE, HIDDEN_SIZE)),
        ))
    language_model = dict(layers=lm_layers, final_norm=ones((HIDDEN_SIZE,)))

    return dict(
        embed_tokens=w((VOCAB_SIZE, HIDDEN_SIZE)),
        vision_embed_tokens=vision,
        language_model=language_model,
    )


# ----------------------------------------------------------------------------
# Main
# ----------------------------------------------------------------------------
if __name__ == "__main__":
    key = jax.random.PRNGKey(0)
    k_params, k_pix, k_ids = jax.random.split(key, 3)

    params = init_params(k_params)

    # One image, HD transform with image size (h=64, w=32) -> h_crop=2, w_crop=1
    # -> 2 sub crops + 1 global crop = 3 crops.
    num_images, num_crops = 1, 3
    pixel_values = jax.random.normal(
        k_pix, (num_images, num_crops, 3, CLIP_IMAGE_SIZE, CLIP_IMAGE_SIZE),
        dtype=jnp.float32)
    image_sizes_static = [(64, 32)]

    # Image feature size: (h_c*w_c + 1)*(H/2)^2 + 1 + (h_c+1)*(H/2)
    H_patch = CLIP_IMAGE_SIZE // CLIP_PATCH_SIZE                  # 4
    h_c, w_c = 2, 1
    num_img_tokens = (h_c * w_c + 1) * (H_patch // 2) ** 2 + 1 + (h_c + 1) * (H_patch // 2)
    assert num_img_tokens == 19

    seq_len = 32
    text_ids = jax.random.randint(k_ids, (seq_len,), 0, IMAGE_TOKEN_ID, dtype=jnp.int32)
    input_ids = jnp.concatenate([
        text_ids[:4],
        jnp.full((num_img_tokens,), IMAGE_TOKEN_ID, dtype=jnp.int32),
        text_ids[4 + num_img_tokens:seq_len],
    ])
    assert input_ids.shape == (seq_len,)
    positions = jnp.arange(seq_len, dtype=jnp.int32)

    hidden_states = phi3v_forward(params, input_ids, positions,
                                  pixel_values, image_sizes_static)
    hidden_states = jax.block_until_ready(hidden_states)
    assert hidden_states.shape == (seq_len, HIDDEN_SIZE)
    assert bool(jnp.all(jnp.isfinite(hidden_states.astype(jnp.float32))))
    print("KERNEL_OK")
</pallas_src>

<mosaic_0001>
module attributes {stable_mosaic.version = 11 : i64} {
  func.func @kernel(%arg0: i32, %arg1: i32, %arg2: i32, %arg3: memref<48x192xf32, #tpu.memory_space<vmem>>, %arg4: memref<192x32xbf16, #tpu.memory_space<vmem>>, %arg5: memref<48x32xbf16, #tpu.memory_space<vmem>>, %arg6: memref<48x32xf32, #tpu.memory_space<vmem>>) attributes {dimension_semantics = [#tpu.dimension_semantics<parallel>, #tpu.dimension_semantics<arbitrary>, #tpu.dimension_semantics<arbitrary>], iteration_bounds = array<i64: 1, 1, 1>, scalar_prefetch = 0 : i64, scratch_operands = 1 : i64, tpu.core_type = #tpu.core_type<tc>, window_params = [{transform_indices = @transform_0, window_bounds = array<i64: 48, 192>}, {transform_indices = @transform_1, window_bounds = array<i64: 192, 32>}, {transform_indices = @transform_2, window_bounds = array<i64: 48, 32>}]} {
    %c0_i32 = arith.constant 0 : i32
    %0 = arith.cmpi eq, %arg2, %c0_i32 : i32
    %1 = arith.extui %0 : i1 to i32
    %c0_i32_0 = arith.constant 0 : i32
    %2 = arith.cmpi ne, %1, %c0_i32_0 : i32
    scf.if %2 {
      %cst_10 = arith.constant 0.000000e+00 : f32
      %13 = vector.broadcast %cst_10 : f32 to vector<48x32xf32>
      %c0_11 = arith.constant 0 : index
      %c0_12 = arith.constant 0 : index
      %14 = vector.load %arg6[%c0_11, %c0_12] : memref<48x32xf32, #tpu.memory_space<vmem>>, vector<48x32xf32>
      tpu.vector_store %arg6[%c0_11, %c0_12], %13 {strides = array<i32>} : memref<48x32xf32, #tpu.memory_space<vmem>>, vector<48x32xf32>,
    } else {
    }
    %c0 = arith.constant 0 : index
    %c0_1 = arith.constant 0 : index
    %3 = vector.load %arg3[%c0, %c0_1] : memref<48x192xf32, #tpu.memory_space<vmem>>, vector<48x192xf32>
    %4 = arith.truncf %3 : vector<48x192xf32> to vector<48x192xbf16>
    %c0_2 = arith.constant 0 : index
    %c0_3 = arith.constant 0 : index
    %5 = vector.load %arg6[%c0_2, %c0_3] : memref<48x32xf32, #tpu.memory_space<vmem>>, vector<48x32xf32>
    %c0_4 = arith.constant 0 : index
    %c0_5 = arith.constant 0 : index
    %6 = vector.load %arg4[%c0_4, %c0_5] : memref<192x32xbf16, #tpu.memory_space<vmem>>, vector<192x32xbf16>
    %cst = arith.constant dense<0.000000e+00> : vector<48x32xf32>
    %7 = tpu.matmul %4, %6, %cst {dimension_numbers = #tpu.dot_dimension_numbers<[1], [0], [0], [1], [0, 0, 1, 1], [], []>} : vector<48x192xbf16>, vector<192x32xbf16>, vector<48x32xf32> -> vector<48x32xf32>
    %8 = arith.addf %5, %7 : vector<48x32xf32>
    %c0_6 = arith.constant 0 : index
    %c0_7 = arith.constant 0 : index
    %9 = vector.load %arg6[%c0_6, %c0_7] : memref<48x32xf32, #tpu.memory_space<vmem>>, vector<48x32xf32>
    tpu.vector_store %arg6[%c0_6, %c0_7], %8 {strides = array<i32>} : memref<48x32xf32, #tpu.memory_space<vmem>>, vector<48x32xf32>,
    %c0_i32_8 = arith.constant 0 : i32
    %10 = arith.cmpi eq, %arg2, %c0_i32_8 : i32
    %11 = arith.extui %10 : i1 to i32
    %c0_i32_9 = arith.constant 0 : i32
    %12 = arith.cmpi ne, %11, %c0_i32_9 : i32
    scf.if %12 {
      %c0_10 = arith.constant 0 : index
      %c0_11 = arith.constant 0 : index
      %13 = vector.load %arg6[%c0_10, %c0_11] : memref<48x32xf32, #tpu.memory_space<vmem>>, vector<48x32xf32>
      %14 = arith.truncf %13 : vector<48x32xf32> to vector<48x32xbf16>
      %c0_12 = arith.constant 0 : index
      %c0_13 = arith.constant 0 : index
      %15 = vector.load %arg5[%c0_12, %c0_13] : memref<48x32xbf16, #tpu.memory_space<vmem>>, vector<48x32xbf16>
      tpu.vector_store %arg5[%c0_12, %c0_13], %14 {strides = array<i32>} : memref<48x32xbf16, #tpu.memory_space<vmem>>, vector<48x32xbf16>,
    } else {
    }
    return
  }
  func.func @transform_0(%arg0: i32, %arg1: i32, %arg2: i32) -> (i32, i32) {
    %c0_i32 = arith.constant 0 : i32
    %c0_i32_0 = arith.constant 0 : i32
    return %arg0, %c0_i32 : i32, i32
  }
  func.func @transform_1(%arg0: i32, %arg1: i32, %arg2: i32) -> (i32, i32) {
    %c0_i32 = arith.constant 0 : i32
    return %arg2, %arg1 : i32, i32
  }
  func.func @transform_2(%arg0: i32, %arg1: i32, %arg2: i32) -> (i32, i32) {
    %c0_i32 = arith.constant 0 : i32
    return %arg0, %arg1 : i32, i32
  }
}

</mosaic_0001>

<llo_original>
// kernel: tpu_custom_call.1
$region0: #{tpu_custom_call.1}
  #allocation0 [shape = 'u32[]', space=smem, size = 0x4, offset = 0x4, fixed_abs, tag = 'smem constant byte address 0x4 - core index']
  #allocation1 [shape = 'u32[144,128]{1,0:T(1,128)}', space=vmem, size = 0x12000, scoped, tag = 'internal scratch']
  #allocation2 [shape = 'f32[48,32]{1,0:T(8,128)}', space=vmem, size = 0x6000, scoped, tag = 'scratch operand']
  %s0 = inlined_call_operand.vmem [shape: f32[48,192], index: 0, kind: input, shape index: {}]
  %s1 = inlined_call_operand.vmem [shape: bf16[192,32], index: 1, kind: input, shape index: {}]
  %s2 = inlined_call_operand.vmem [shape: bf16[48,32], index: 2, kind: output, shape index: {}]
  %s3 = sld [smem:[#allocation0]]
  $region26: #{tpu_custom_call.1} parent=0
    _
  %s5 = ssub.s32 1, %s3
  %s6 = scalar_select 0, %s5, %s3
  // Predicated region
  $region2: #{tpu_custom_call.1} parent=0 // pred_check
    _
  $region3: #{tpu_custom_call.1} parent=0 // pred_check_branch
    %8 = sbr.rel (0) target = $region5
  $region4: #{tpu_custom_call.1} parent=0 // pred_region
    _
  $region5: #{tpu_custom_call.1} parent=0 // pred_fallthru
    _
  // Predicated region
  $region6: #{tpu_custom_call.1} parent=0 // pred_check
    _
  $region7: #{tpu_custom_call.1} parent=0 // pred_check_branch
    %10 = sbr.rel (0) target = $region9
  $region8: #{tpu_custom_call.1} parent=0 // pred_region
    _
  $region9: #{tpu_custom_call.1} parent=0 // pred_fallthru
    _
  %p12 = scmp.eq.s32.totalorder 0, 0
  // Predicated region
  $region10: #{tpu_custom_call.1} parent=0 // pred_check
    %p13 = pneg %p12
  $region11: #{tpu_custom_call.1} parent=0 // pred_check_branch
    %15 = sbr.rel (%p13) target = $region13
  $region12: #{tpu_custom_call.1} parent=0 // pred_region
    %vm16 = vcmask 261120
    %17 = vst.msk [vmem:[#allocation2] sm:$0xff] %vm16, 0.0
    %18 = vst.msk [vmem:[#allocation2 + $0x8] sm:$0xff] %vm16, 0.0
    %19 = vst.msk [vmem:[#allocation2 + $0x10] sm:$0xff] %vm16, 0.0
    %20 = vst.msk [vmem:[#allocation2 + $0x18] sm:$0xff] %vm16, 0.0
    %21 = vst.msk [vmem:[#allocation2 + $0x20] sm:$0xff] %vm16, 0.0
    %22 = vst.msk [vmem:[#allocation2 + $0x28] sm:$0xff] %vm16, 0.0
  $region13: #{tpu_custom_call.1} parent=0 // pred_fallthru
    _
  %v23 = vld [vmem:[%s0] sm:$0xff]
  %v24 = vld [vmem:[%s0 + $0x8] sm:$0xff]
  %v25 = vld [vmem:[%s0 + $0x10] sm:$0xff]
  %v26 = vld [vmem:[%s0 + $0x18] sm:$0xff]
  %v27 = vld [vmem:[%s0 + $0x20] sm:$0xff]
  %v28 = vld [vmem:[%s0 + $0x28] sm:$0xff]
  %v29 = vld [vmem:[%s0 + $0x30] sm:$0xff]
  %v30 = vld [vmem:[%s0 + $0x38] sm:$0xff]
  %v31 = vld [vmem:[%s0 + $0x40] sm:$0xff]
  %v32 = vld [vmem:[%s0 + $0x48] sm:$0xff]
  %v33 = vld [vmem:[%s0 + $0x50] sm:$0xff]
  %v34 = vld [vmem:[%s0 + $0x58] sm:$0xff]
  %v35 = vpack.c.bf16 %v25, %v23
  %v36 = vpack.c.bf16 %v26, %v24
  %v37 = vpack.c.bf16 %v29, %v27
  %v38 = vpack.c.bf16 %v30, %v28
  %v39 = vpack.c.bf16 %v33, %v31
  %v40 = vpack.c.bf16 %v34, %v32
  %v41 = vld [vmem:[#allocation2] sm:$0xff]
  %v42 = vld [vmem:[#allocation2 + $0x8] sm:$0xff]
  %v43 = vld [vmem:[#allocation2 + $0x10] sm:$0xff]
  %v44 = vld [vmem:[#allocation2 + $0x18] sm:$0xff]
  %v45 = vld [vmem:[#allocation2 + $0x20] sm:$0xff]
  %v46 = vld [vmem:[#allocation2 + $0x28] sm:$0xff]
  %v47 = vld [vmem:[%s1] sm:$0xf]
  %v48 = vld [vmem:[%s1 + $0x4] sm:$0xf]
  %v49 = vld [vmem:[%s1 + $0x8] sm:$0xf]
  %v50 = vld [vmem:[%s1 + $0xc] sm:$0xf]
  %v51 = vld [vmem:[%s1 + $0x10] sm:$0xf]
  %v52 = vld [vmem:[%s1 + $0x14] sm:$0xf]
  %v53 = vld [vmem:[%s1 + $0x18] sm:$0xf]
  %v54 = vld [vmem:[%s1 + $0x1c] sm:$0xf]
  %v55 = vld [vmem:[%s1 + $0x20] sm:$0xf]
  %v56 = vld [vmem:[%s1 + $0x24] sm:$0xf]
  %v57 = vld [vmem:[%s1 + $0x28] sm:$0xf]
  %v58 = vld [vmem:[%s1 + $0x2c] sm:$0xf]
  %v59 = vld [vmem:[%s1 + $0x30] sm:$0xf]
  %v60 = vld [vmem:[%s1 + $0x34] sm:$0xf]
  %v61 = vld [vmem:[%s1 + $0x38] sm:$0xf]
  %v62 = vld [vmem:[%s1 + $0x3c] sm:$0xf]
  %v63 = vld [vmem:[%s1 + $0x40] sm:$0xf]
  %v64 = vld [vmem:[%s1 + $0x44] sm:$0xf]
  %v65 = vld [vmem:[%s1 + $0x48] sm:$0xf]
  %v66 = vld [vmem:[%s1 + $0x4c] sm:$0xf]
  %v67 = vld [vmem:[%s1 + $0x50] sm:$0xf]
  %v68 = vld [vmem:[%s1 + $0x54] sm:$0xf]
  %v69 = vld [vmem:[%s1 + $0x58] sm:$0xf]
  %v70 = vld [vmem:[%s1 + $0x5c] sm:$0xf]
  %v95 = vunpack.c.l.b16 %v47
  %v96 = vunpack.c.l.b16 %v48
  %v97 = vunpack.c.l.b16 %v49
  %v98 = vunpack.c.l.b16 %v50
  %v99 = vunpack.c.l.b16 %v51
  %v100 = vunpack.c.l.b16 %v52
  %v101 = vunpack.c.l.b16 %v53
  %v102 = vunpack.c.l.b16 %v54
  %v103 = vunpack.c.l.b16 %v55
  %v104 = vunpack.c.l.b16 %v56
  %v105 = vunpack.c.l.b16 %v57
  %v106 = vunpack.c.l.b16 %v58
  %v107 = vunpack.c.l.b16 %v59
  %v108 = vunpack.c.l.b16 %v60
  %v109 = vunpack.c.l.b16 %v61
  %v110 = vunpack.c.l.b16 %v62
  %v111 = vunpack.c.l.b16 %v63
  %v112 = vunpack.c.l.b16 %v64
  %v113 = vunpack.c.l.b16 %v65
  %v114 = vunpack.c.l.b16 %v66
  %v115 = vunpack.c.l.b16 %v67
  %v116 = vunpack.c.l.b16 %v68
  %v117 = vunpack.c.l.b16 %v69
  %v118 = vunpack.c.l.b16 %v70
  %v119 = vpack.c.b16 %v96, %v95
  %v120 = vpack.c.b16 %v98, %v97
  %v121 = vpack.c.b16 %v100, %v99
  %v122 = vpack.c.b16 %v102, %v101
  %v123 = vpack.c.b16 %v104, %v103
  %v124 = vpack.c.b16 %v106, %v105
  %v125 = vpack.c.b16 %v108, %v107
  %v126 = vpack.c.b16 %v110, %v109
  %v127 = vpack.c.b16 %v112, %v111
  %v128 = vpack.c.b16 %v114, %v113
  %v129 = vpack.c.b16 %v116, %v115
  %v130 = vpack.c.b16 %v118, %v117
  %vm143 = vcmask 523264
  %v145 = vsel %vm143, %v36, 0
  %v148 = vsel %vm143, %v38, 0
  %v151 = vsel %vm143, %v40, 0
  %153 = vmatprep.subr.bf16.mxu0 0
  %154 = vmatpush1.bf16.msra.mxu0 %v126
  %155 = vmatprep.subr.bf16.mxu0 0
  %156 = vmatpush1.bf16.msra.mxu0 %v125
  %157 = vmatprep.subr.bf16.mxu0 0
  %158 = vmatpush1.bf16.msra.mxu0 %v124
  %159 = vmatprep.subr.bf16.mxu0 0
  %160 = vmatpush1.bf16.msra.mxu0 %v123
  %161 = vmatprep.subr.bf16.mxu0 0
  %162 = vmatpush1.bf16.msra.mxu0 %v122
  %163 = vmatprep.subr.bf16.mxu0 0
  %164 = vmatpush1.bf16.msra.mxu0 %v121
  %165 = vmatprep.subr.bf16.mxu0 0
  %166 = vmatpush1.bf16.msra.mxu0 %v120
  %167 = vmatprep.subr.bf16.mxu0 0
  %168 = vmatpush1.bf16.msra.mxu0 %v119
  %169 = vmatprep.subr.bf16.mxu0 0
  %170 = vmatpush2.bf16.msra.mxu0 0
  %171 = vmatprep.subr.bf16.mxu0 0
  %172 = vmatpush2.bf16.msra.mxu0 0
  %173 = vmatprep.subr.bf16.mxu0 0
  %174 = vmatpush2.bf16.msra.mxu0 0
  %175 = vmatprep.subr.bf16.mxu0 0
  %176 = vmatpush2.bf16.msra.mxu0 0
  %177 = vmatprep.subr.bf16.mxu0 0
  %178 = vmatpush2.bf16.msra.mxu0 %v130
  %179 = vmatprep.subr.bf16.mxu0 0
  %180 = vmatpush2.bf16.msra.mxu0 %v129
  %181 = vmatprep.subr.bf16.mxu0 0
  %182 = vmatpush2.bf16.msra.mxu0 %v128
  %183 = vmatprep.subr.bf16.mxu0 0
  %184 = vmatpush2.bf16.msra.mxu0 %v127
  %185 = vmatprep.mubr.bf16.mxu0 %v145
  %186 = vmatmul.mubr.bf16.gmra.mxu0 %v35
  %v187 = vpop.f32.mrf.mxu0
  %v188 = vadd.f32 0.0, %v187
  %v189 = vpop.f32.mrf.mxu0
  %v190 = vpop.f32.mrf.mxu0
  %v191 = vadd.f32 0.0, %v190
  %v192 = vpop.f32.mrf.mxu0
  %193 = vmatprep.mubr.bf16.mxu0 %v148
  %194 = vmatmul.mubr.bf16.gmra.mxu0 %v37
  %v195 = vpop.f32.mrf.mxu0
  %v196 = vadd.f32 0.0, %v195
  %v197 = vpop.f32.mrf.mxu0
  %v198 = vpop.f32.mrf.mxu0
  %v199 = vadd.f32 0.0, %v198
  %v200 = vpop.f32.mrf.mxu0
  %201 = vmatprep.mubr.bf16.mxu0 %v151
  %202 = vmatmul.mubr.bf16.gmra.mxu0 %v39
  %v203 = vpop.f32.mrf.mxu0
  %v204 = vadd.f32 0.0, %v203
  %v205 = vpop.f32.mrf.mxu0
  %v206 = vpop.f32.mrf.mxu0
  %v207 = vadd.f32 0.0, %v206
  %v208 = vpop.f32.mrf.mxu0
  %209 = vdwg.mxu0
  %v210 = vadd.f32 %v41, %v188
  %v211 = vadd.f32 %v42, %v191
  %v212 = vadd.f32 %v43, %v196
  %v213 = vadd.f32 %v44, %v199
  %v214 = vadd.f32 %v45, %v204
  %v215 = vadd.f32 %v46, %v207
  %vm216 = vcmask 261120
  %217 = vst.msk [vmem:[#allocation2] sm:$0xff] %vm216, %v210
  %218 = vst.msk [vmem:[#allocation2 + $0x8] sm:$0xff] %vm216, %v211
  %219 = vst.msk [vmem:[#allocation2 + $0x10] sm:$0xff] %vm216, %v212
  %220 = vst.msk [vmem:[#allocation2 + $0x18] sm:$0xff] %vm216, %v213
  %221 = vst.msk [vmem:[#allocation2 + $0x20] sm:$0xff] %vm216, %v214
  %222 = vst.msk [vmem:[#allocation2 + $0x28] sm:$0xff] %vm216, %v215
  // Predicated region
  $region14: #{tpu_custom_call.1} parent=0 // pred_check
    %p223 = pneg %p12
  $region15: #{tpu_custom_call.1} parent=0 // pred_check_branch
    %225 = sbr.rel (%p223) target = $region17
  $region16: #{tpu_custom_call.1} parent=0 // pred_region
    %v226 = vld [vmem:[#allocation2] sm:$0xff]
    %v227 = vld [vmem:[#allocation2 + $0x8] sm:$0xff]
    %v228 = vld [vmem:[#allocation2 + $0x10] sm:$0xff]
    %v229 = vld [vmem:[#allocation2 + $0x18] sm:$0xff]
    %v230 = vld [vmem:[#allocation2 + $0x20] sm:$0xff]
    %v231 = vld [vmem:[#allocation2 + $0x28] sm:$0xff]
    %v232 = vpack.c.bf16 %v227, %v226
    %v233 = vpack.c.bf16 %v229, %v228
    %v234 = vpack.c.bf16 %v231, %v230
    %v238 = vunpack.c.l.b16 %v232
    %v239 = vunpack.c.h.b16 %v232
    %v240 = vunpack.c.l.b16 %v233
    %v241 = vunpack.c.h.b16 %v233
    %v242 = vunpack.c.l.b16 %v234
    %v243 = vunpack.c.h.b16 %v234
    %v244 = vpack.c.b16 %v238, %v238
    %v245 = vpack.c.b16 %v239, %v239
    %v246 = vpack.c.b16 %v240, %v240
    %v247 = vpack.c.b16 %v241, %v241
    %v248 = vpack.c.b16 %v242, %v242
    %v249 = vpack.c.b16 %v243, %v243
    %vm256 = vcmask 257024
    %257 = vst.msk [vmem:[%s2] sm:$0xf] %vm256, %v244
    %258 = vst.msk [vmem:[%s2 + $0x4] sm:$0xf] %vm256, %v245
    %259 = vst.msk [vmem:[%s2 + $0x8] sm:$0xf] %vm256, %v246
    %260 = vst.msk [vmem:[%s2 + $0xc] sm:$0xf] %vm256, %v247
    %261 = vst.msk [vmem:[%s2 + $0x10] sm:$0xf] %vm256, %v248
    %262 = vst.msk [vmem:[%s2 + $0x14] sm:$0xf] %vm256, %v249
  $region17: #{tpu_custom_call.1} parent=0 // pred_fallthru
    _
  // Predicated region
  $region18: #{tpu_custom_call.1} parent=0 // pred_check
    _
  $region19: #{tpu_custom_call.1} parent=0 // pred_check_branch
    %264 = sbr.rel (0) target = $region21
  $region20: #{tpu_custom_call.1} parent=0 // pred_region
    _
  $region21: #{tpu_custom_call.1} parent=0 // pred_fallthru
    _
  // Predicated region
  $region22: #{tpu_custom_call.1} parent=0 // pred_check
    _
  $region23: #{tpu_custom_call.1} parent=0 // pred_check_branch
    %266 = sbr.rel (0) target = $region25
  $region24: #{tpu_custom_call.1} parent=0 // pred_region
    _
  $region25: #{tpu_custom_call.1} parent=0 // pred_fallthru
    _

</llo_original>
